<compile_context>
chip_gen: v5e
topology: v5e:2x2
jax: 0.10.0
libtpu: 0.0.40
codegen_flags: <defaults>
</compile_context>

<pallas_src>
import math
import jax
import jax.numpy as jnp
from jax.experimental import pallas as pl
from jax.experimental.pallas import tpu as pltpu


# ~4 MiB per x buffer: safe for v7x (64 MiB physical / 32 MiB scoped VMEM with
# double buffering), and already in the >=85%-of-HBM-roofline regime measured
# for tiled mem-bound kernels on v5e/v6e.
_TARGET_X_TILE_BYTES = 4 * 1024 * 1024


def _ewl_kernel(x_ref, w_ref, b_ref, o_ref):
    # x_ref: (TB, C, D)  slab of batch rows
    # w_ref: (C, D)      full weight (constant index map -> resident)
    # b_ref: (1, C)      bias
    # o_ref: (TB, C)     output rows (sublane-dense block)
    x = x_ref[...].astype(jnp.float32)
    w = w_ref[...].astype(jnp.float32)
    s = jnp.sum(x * w[None, :, :], axis=2)              # (TB, C)
    o_ref[...] = (s + b_ref[...]).astype(o_ref.dtype)


def _choose_batch_tile(B, C, D, itemsize):
    """Pick TB so the x tile is ~_TARGET_X_TILE_BYTES; TB % 8 == 0 or TB == B."""
    row_bytes = max(1, C * D * itemsize)
    tb = max(1, _TARGET_X_TILE_BYTES // row_bytes)
    if tb >= B:
        return B                      # one slab covers the whole (small) batch
    tb = max(8, (tb // 8) * 8)        # sublane-dense output block
    return min(tb, B)


def element_wise_layer(x, weight, bias, *, tb=None):
    """x: (B, C, D), weight: (C, D), bias: (C,) -> (B, C) float32."""
    B, C, D = x.shape
    assert weight.shape == (C, D)
    assert bias.shape == (C,)
    bias2d = bias.reshape(1, C).astype(jnp.float32)

    if tb is None:
        tb = _choose_batch_tile(B, C, D, jnp.dtype(x.dtype).itemsize)
    grid = (pl.cdiv(B, tb),)

    cost = pl.CostEstimate(
        flops=2 * B * C * D,
        transcendentals=0,
        bytes_accessed=B * C * D * jnp.dtype(x.dtype).itemsize
        + C * D * jnp.dtype(weight.dtype).itemsize
        + B * C * 4,
    )

    return pl.pallas_call(
        _ewl_kernel,
        out_shape=jax.ShapeDtypeStruct((B, C), jnp.float32),
        grid_spec=pl.GridSpec(
            grid=grid,
            in_specs=[
                pl.BlockSpec((tb, C, D), lambda b: (b, 0, 0)),  # batch slab
                pl.BlockSpec((C, D), lambda b: (0, 0)),         # weight (resident)
                pl.BlockSpec((1, C), lambda b: (0, 0)),         # bias (resident)
            ],
            out_specs=pl.BlockSpec((tb, C), lambda b: (b, 0)),
        ),
        compiler_params=pltpu.CompilerParams(
            dimension_semantics=("parallel",),
        ),
        cost_estimate=cost,
    )(x, weight, bias2d)


if __name__ == "__main__":
    # Small config consistent with the module's forward (B, in, out) input.
    batch = 16
    in_features = 8
    out_features = 128

    key = jax.random.PRNGKey(0)
    k_w, k_b, k_x = jax.random.split(key, 3)

    # Parameter init matching reset_parameters: uniform(-stdv, stdv),
    # stdv = 1/sqrt(out_features).
    stdv = 1.0 / math.sqrt(out_features)
    weight = jax.random.uniform(
        k_w, (in_features, out_features), jnp.float32, -stdv, stdv
    )
    bias = jax.random.uniform(k_b, (in_features,), jnp.float32, -stdv, stdv)
    x = jax.random.normal(k_x, (batch, in_features, out_features), jnp.float32)

    out = element_wise_layer(x, weight, bias)
    out = jax.block_until_ready(out)

    # Pure-JAX reference check
    ref = jnp.sum(x * weight[None, :, :], axis=2) + bias[None, :]
    assert out.shape == (batch, in_features)
    assert jnp.allclose(out, ref, atol=1e-5, rtol=1e-5)

    print("KERNEL_OK")
</pallas_src>

<mosaic_0001>
module attributes {stable_mosaic.version = 11 : i64} {
  func.func @_ewl_kernel(%arg0: i32, %arg1: memref<16x8x128xf32, #tpu.memory_space<vmem>>, %arg2: memref<8x128xf32, #tpu.memory_space<vmem>>, %arg3: memref<1x8xf32, #tpu.memory_space<vmem>>, %arg4: memref<16x8xf32, #tpu.memory_space<vmem>>) attributes {dimension_semantics = [#tpu.dimension_semantics<parallel>], iteration_bounds = array<i64: 1>, scalar_prefetch = 0 : i64, scratch_operands = 0 : i64, tpu.core_type = #tpu.core_type<tc>, window_params = [{transform_indices = @transform_0, window_bounds = array<i64: 16, 8, 128>}, {pipeline_mode = #tpu.pipeline_mode<synchronous>, transform_indices = @transform_1, window_bounds = array<i64: 8, 128>}, {pipeline_mode = #tpu.pipeline_mode<synchronous>, transform_indices = @transform_2, window_bounds = array<i64: 1, 8>}, {transform_indices = @transform_3, window_bounds = array<i64: 16, 8>}]} {
    %c0 = arith.constant 0 : index
    %c0_0 = arith.constant 0 : index
    %c0_1 = arith.constant 0 : index
    %0 = vector.load %arg1[%c0, %c0_0, %c0_1] : memref<16x8x128xf32, #tpu.memory_space<vmem>>, vector<16x8x128xf32>
    %c0_2 = arith.constant 0 : index
    %c0_3 = arith.constant 0 : index
    %1 = vector.load %arg2[%c0_2, %c0_3] : memref<8x128xf32, #tpu.memory_space<vmem>>, vector<8x128xf32>
    %2 = vector.shape_cast %1 : vector<8x128xf32> to vector<1x8x128xf32>
    %3 = vector.broadcast %2 : vector<1x8x128xf32> to vector<16x8x128xf32>
    %4 = arith.mulf %0, %3 : vector<16x8x128xf32>
    %cst = arith.constant dense<0.000000e+00> : vector<16x8xf32>
    %5 = vector.multi_reduction <add>, %4, %cst [2] : vector<16x8x128xf32> to vector<16x8xf32>
    %c0_4 = arith.constant 0 : index
    %c0_5 = arith.constant 0 : index
    %6 = vector.load %arg3[%c0_4, %c0_5] : memref<1x8xf32, #tpu.memory_space<vmem>>, vector<1x8xf32>
    %7 = vector.broadcast %6 : vector<1x8xf32> to vector<16x8xf32>
    %8 = arith.addf %5, %7 : vector<16x8xf32>
    %c0_6 = arith.constant 0 : index
    %c0_7 = arith.constant 0 : index
    %9 = vector.load %arg4[%c0_6, %c0_7] : memref<16x8xf32, #tpu.memory_space<vmem>>, vector<16x8xf32>
    tpu.vector_store %arg4[%c0_6, %c0_7], %8 {strides = array<i32>} : memref<16x8xf32, #tpu.memory_space<vmem>>, vector<16x8xf32>,
    return
  }
  func.func @transform_0(%arg0: i32) -> (i32, i32, i32) {
    %c0_i32 = arith.constant 0 : i32
    %c0_i32_0 = arith.constant 0 : i32
    %c0_i32_1 = arith.constant 0 : i32
    return %arg0, %c0_i32, %c0_i32_0 : i32, i32, i32
  }
  func.func @transform_1(%arg0: i32) -> (i32, i32) {
    %c0_i32 = arith.constant 0 : i32
    %c0_i32_0 = arith.constant 0 : i32
    %c0_i32_1 = arith.constant 0 : i32
    return %c0_i32, %c0_i32_0 : i32, i32
  }
  func.func @transform_2(%arg0: i32) -> (i32, i32) {
    %c0_i32 = arith.constant 0 : i32
    %c0_i32_0 = arith.constant 0 : i32
    %c0_i32_1 = arith.constant 0 : i32
    return %c0_i32, %c0_i32_0 : i32, i32
  }
  func.func @transform_3(%arg0: i32) -> (i32, i32) {
    %c0_i32 = arith.constant 0 : i32
    %c0_i32_0 = arith.constant 0 : i32
    return %arg0, %c0_i32 : i32, i32
  }
}

</mosaic_0001>

<llo_original>
// kernel: tpu_custom_call.1
$region0: #{tpu_custom_call.1}
  #allocation0 [shape = 'u32[]', space=smem, size = 0x4, offset = 0x4, fixed_abs, tag = 'smem constant byte address 0x4 - core index']
  #allocation1 [shape = 'u32[72,128]{1,0:T(1,128)}', space=vmem, size = 0x9000, scoped, tag = 'internal scratch']
  %s0 = inlined_call_operand.hbm [shape: f32[16,8,128], index: 0, kind: input, shape index: {}]
  %s1 = inlined_call_operand.hbm [shape: f32[8,128], index: 1, kind: input, shape index: {}]
  %s2 = inlined_call_operand.vmem [shape: f32[1,8], index: 2, kind: input, shape index: {}]
  %s3 = inlined_call_operand.vmem [shape: f32[16,8], index: 3, kind: output, shape index: {}]
  %s4 = sld [smem:[#allocation0]]
  $region30: #{tpu_custom_call.1} parent=0
    _
  %s6 = ssub.s32 1, %s4
  %s7 = scalar_select 0, %s6, %s4
  $region1: #{tpu_custom_call.1} parent=0
    #allocation2 [shape = 'u8[65536]{0}', space=vmem, size = 0x10000, scoped, tag = 'input window, operand 0, single buffered']
    #allocation3 [shape = 's32[1]{0}', space=sflag, size = 0x4, scoped, tag = 'scoped memory for tpu_custom_call.1']
    #allocation4 [shape = 'u8[4096]{0}', space=vmem, size = 0x1000, scoped, tag = 'input window, operand 1, single buffered']
    #allocation5 [shape = 's32[1]{0}', space=sflag, size = 0x4, scoped, tag = 'scoped memory for tpu_custom_call.1']
    %8 = vsyncpa [#allocation3], 0
    %9 = vsyncpa [#allocation5], 0
    // Predicated region
    $region2: #{tpu_custom_call.1} parent=1 // pred_check
      _
    $region3: #{tpu_custom_call.1} parent=1 // pred_check_branch
      %11 = sbr.rel (0) target = $region5
    $region4: #{tpu_custom_call.1} parent=1 // pred_region
      %13 = vsyncadd [#allocation3], 0
      %s14 = sshll.u32 %s0, 4
      %s15 = int_to_ptr.hbm [resolvable:$true] %s14
      %s16 = sshll.u32 [#allocation2], 4
      %s17 = int_to_ptr.vmem [resolvable:$true] %s16
      %22 = dma.hbm_to_vmem [thread:$0]  %s15, 2048, %s17, [#allocation3], 128, 128, 8
    $region5: #{tpu_custom_call.1} parent=1 // pred_fallthru
      _
    // Predicated region
    $region6: #{tpu_custom_call.1} parent=1 // pred_check
      _
    $region7: #{tpu_custom_call.1} parent=1 // pred_check_branch
      %24 = sbr.rel (0) target = $region9
    $region8: #{tpu_custom_call.1} parent=1 // pred_region
      %26 = vsyncadd [#allocation5], 0
      %s28 = sshll.u32 %s1, 4
      %s29 = int_to_ptr.hbm [resolvable:$true] %s28
      %s30 = sshll.u32 [#allocation4], 4
      %s31 = int_to_ptr.vmem [resolvable:$true] %s30
      %33 = dma.hbm_to_vmem [thread:$0]  %s29, 128, %s31, [#allocation5]
    $region9: #{tpu_custom_call.1} parent=1 // pred_fallthru
      _
    // Predicated region
    $region10: #{tpu_custom_call.1} parent=1 // pred_check
      _
    $region11: #{tpu_custom_call.1} parent=1 // pred_check_branch
      %35 = sbr.rel (0) target = $region13
    $region12: #{tpu_custom_call.1} parent=1 // pred_region
      _
    $region13: #{tpu_custom_call.1} parent=1 // pred_fallthru
      _
    // Predicated region
    $region14: #{tpu_custom_call.1} parent=1 // pred_check
      _
    $region15: #{tpu_custom_call.1} parent=1 // pred_check_branch
      %37 = sbr.rel (0) target = $region17
    $region16: #{tpu_custom_call.1} parent=1 // pred_region
      %39 = dma.done [#allocation3], 2048
    $region17: #{tpu_custom_call.1} parent=1 // pred_fallthru
      _
    // Predicated region
    $region18: #{tpu_custom_call.1} parent=1 // pred_check
      _
    $region19: #{tpu_custom_call.1} parent=1 // pred_check_branch
      %41 = sbr.rel (0) target = $region21
    $region20: #{tpu_custom_call.1} parent=1 // pred_region
      %43 = dma.done [#allocation5], 128
    $region21: #{tpu_custom_call.1} parent=1 // pred_fallthru
      _
    %v44 = vld [vmem:[#allocation2] sm:$0xff]
    %v45 = vld [vmem:[#allocation2 + $0x8] sm:$0xff]
    %v46 = vld [vmem:[#allocation2 + $0x10] sm:$0xff]
    %v47 = vld [vmem:[#allocation2 + $0x18] sm:$0xff]
    %v48 = vld [vmem:[#allocation2 + $0x20] sm:$0xff]
    %v49 = vld [vmem:[#allocation2 + $0x28] sm:$0xff]
    %v50 = vld [vmem:[#allocation2 + $0x30] sm:$0xff]
    %v51 = vld [vmem:[#allocation2 + $0x38] sm:$0xff]
    %v52 = vld [vmem:[#allocation2 + $0x40] sm:$0xff]
    %v53 = vld [vmem:[#allocation2 + $0x48] sm:$0xff]
    %v54 = vld [vmem:[#allocation2 + $0x50] sm:$0xff]
    %v55 = vld [vmem:[#allocation2 + $0x58] sm:$0xff]
    %v56 = vld [vmem:[#allocation2 + $0x60] sm:$0xff]
    %v57 = vld [vmem:[#allocation2 + $0x68] sm:$0xff]
    %v58 = vld [vmem:[#allocation2 + $0x70] sm:$0xff]
    %v59 = vld [vmem:[#allocation2 + $0x78] sm:$0xff]
    %v60 = vld [vmem:[#allocation4] sm:$0xff]
    %v61 = vmul.f32 %v44, %v60
    %v62 = vmul.f32 %v45, %v60
    %v63 = vmul.f32 %v46, %v60
    %v64 = vmul.f32 %v47, %v60
    %v65 = vmul.f32 %v48, %v60
    %v66 = vmul.f32 %v49, %v60
    %v67 = vmul.f32 %v50, %v60
    %v68 = vmul.f32 %v51, %v60
    %v69 = vmul.f32 %v52, %v60
    %v70 = vmul.f32 %v53, %v60
    %v71 = vmul.f32 %v54, %v60
    %v72 = vmul.f32 %v55, %v60
    %v73 = vmul.f32 %v56, %v60
    %v74 = vmul.f32 %v57, %v60
    %v75 = vmul.f32 %v58, %v60
    %v76 = vmul.f32 %v59, %v60
    %77 = vadd.xlane.f32.xlu0 %v61
    %v78 = vpop.xlane.xlu0 %77
    %79 = vadd.xlane.f32.xlu0 %v62
    %v80 = vpop.xlane.xlu0 %79
    %81 = vadd.xlane.f32.xlu0 %v63
    %v82 = vpop.xlane.xlu0 %81
    %83 = vadd.xlane.f32.xlu0 %v64
    %v84 = vpop.xlane.xlu0 %83
    %85 = vadd.xlane.f32.xlu0 %v65
    %v86 = vpop.xlane.xlu0 %85
    %87 = vadd.xlane.f32.xlu0 %v66
    %v88 = vpop.xlane.xlu0 %87
    %89 = vadd.xlane.f32.xlu0 %v67
    %v90 = vpop.xlane.xlu0 %89
    %91 = vadd.xlane.f32.xlu0 %v68
    %v92 = vpop.xlane.xlu0 %91
    %93 = vadd.xlane.f32.xlu0 %v69
    %v94 = vpop.xlane.xlu0 %93
    %95 = vadd.xlane.f32.xlu0 %v70
    %v96 = vpop.xlane.xlu0 %95
    %97 = vadd.xlane.f32.xlu0 %v71
    %v98 = vpop.xlane.xlu0 %97
    %99 = vadd.xlane.f32.xlu0 %v72
    %v100 = vpop.xlane.xlu0 %99
    %101 = vadd.xlane.f32.xlu0 %v73
    %v102 = vpop.xlane.xlu0 %101
    %103 = vadd.xlane.f32.xlu0 %v74
    %v104 = vpop.xlane.xlu0 %103
    %105 = vadd.xlane.f32.xlu0 %v75
    %v106 = vpop.xlane.xlu0 %105
    %107 = vadd.xlane.f32.xlu0 %v76
    %v108 = vpop.xlane.xlu0 %107
    %v109 = vld [vmem:[%s2] sm:$0x1]
    %v111 = vperm.slane %v109, 0
    %v112 = vlaneseq
    %v113 = vshrl.u32 %v112, 7
    %115 = vset.pattern.permute.xlu0 %v113
    %116 = vperm.xlu0 %115, %v111
    %v117 = vpop.permute.xlu0 %116
    %v119 = vadd.f32 %v78, %v117
    %v120 = vadd.f32 %v80, %v117
    %v121 = vadd.f32 %v82, %v117
    %v122 = vadd.f32 %v84, %v117
    %v123 = vadd.f32 %v86, %v117
    %v124 = vadd.f32 %v88, %v117
    %v125 = vadd.f32 %v90, %v117
    %v126 = vadd.f32 %v92, %v117
    %v127 = vadd.f32 %v94, %v117
    %v128 = vadd.f32 %v96, %v117
    %v129 = vadd.f32 %v98, %v117
    %v130 = vadd.f32 %v100, %v117
    %v131 = vadd.f32 %v102, %v117
    %v132 = vadd.f32 %v104, %v117
    %v133 = vadd.f32 %v106, %v117
    %v134 = vadd.f32 %v108, %v117
    %151 = vset.pattern.permute.xlu0 0
    %152 = vperm.xlu0 %151, %v119
    %v153 = vpop.permute.xlu0 %152
    %154 = vset.pattern.permute.xlu0 0
    %155 = vperm.xlu0 %154, %v120
    %v156 = vpop.permute.xlu0 %155
    %157 = vset.pattern.permute.xlu0 0
    %158 = vperm.xlu0 %157, %v121
    %v159 = vpop.permute.xlu0 %158
    %160 = vset.pattern.permute.xlu0 0
    %161 = vperm.xlu0 %160, %v122
    %v162 = vpop.permute.xlu0 %161
    %163 = vset.pattern.permute.xlu0 0
    %164 = vperm.xlu0 %163, %v123
    %v165 = vpop.permute.xlu0 %164
    %166 = vset.pattern.permute.xlu0 0
    %167 = vperm.xlu0 %166, %v124
    %v168 = vpop.permute.xlu0 %167
    %169 = vset.pattern.permute.xlu0 0
    %170 = vperm.xlu0 %169, %v125
    %v171 = vpop.permute.xlu0 %170
    %172 = vset.pattern.permute.xlu0 0
    %173 = vperm.xlu0 %172, %v126
    %v174 = vpop.permute.xlu0 %173
    %175 = vset.pattern.permute.xlu0 0
    %176 = vperm.xlu0 %175, %v127
    %v177 = vpop.permute.xlu0 %176
    %178 = vset.pattern.permute.xlu0 0
    %179 = vperm.xlu0 %178, %v128
    %v180 = vpop.permute.xlu0 %179
    %181 = vset.pattern.permute.xlu0 0
    %182 = vperm.xlu0 %181, %v129
    %v183 = vpop.permute.xlu0 %182
    %184 = vset.pattern.permute.xlu0 0
    %185 = vperm.xlu0 %184, %v130
    %v186 = vpop.permute.xlu0 %185
    %187 = vset.pattern.permute.xlu0 0
    %188 = vperm.xlu0 %187, %v131
    %v189 = vpop.permute.xlu0 %188
    %190 = vset.pattern.permute.xlu0 0
    %191 = vperm.xlu0 %190, %v132
    %v192 = vpop.permute.xlu0 %191
    %193 = vset.pattern.permute.xlu0 0
    %194 = vperm.xlu0 %193, %v133
    %v195 = vpop.permute.xlu0 %194
    %196 = vset.pattern.permute.xlu0 0
    %197 = vperm.xlu0 %196, %v134
    %v198 = vpop.permute.xlu0 %197
    %v199 = vlaneseq
    %v200 = vand.u32 %v199, 127
    %v201 = vperm.slane %v153, %v200
    %v202 = vperm.slane %v156, %v200
    %v203 = vperm.slane %v159, %v200
    %v204 = vperm.slane %v162, %v200
    %v205 = vperm.slane %v165, %v200
    %v206 = vperm.slane %v168, %v200
    %v207 = vperm.slane %v171, %v200
    %v208 = vperm.slane %v174, %v200
    %v209 = vperm.slane %v177, %v200
    %v210 = vperm.slane %v180, %v200
    %v211 = vperm.slane %v183, %v200
    %v212 = vperm.slane %v186, %v200
    %v213 = vperm.slane %v189, %v200
    %v214 = vperm.slane %v192, %v200
    %v215 = vperm.slane %v195, %v200
    %v216 = vperm.slane %v198, %v200
    %vm217 = vcmask 1041409
    %v218 = vsel %vm217, %v202, %v201
    %vm219 = vcmask 1042434
    %v220 = vsel %vm219, %v203, %v218
    %vm221 = vcmask 1043459
    %v222 = vsel %vm221, %v204, %v220
    %vm223 = vcmask 1044484
    %v224 = vsel %vm223, %v205, %v222
    %vm225 = vcmask 1045509
    %v226 = vsel %vm225, %v206, %v224
    %vm227 = vcmask 1046534
    %v228 = vsel %vm227, %v207, %v226
    %vm229 = vcmask 1047559
    %v230 = vsel %vm229, %v208, %v228
    %v231 = vsel %vm217, %v210, %v209
    %v232 = vsel %vm219, %v211, %v231
    %v233 = vsel %vm221, %v212, %v232
    %v234 = vsel %vm223, %v213, %v233
    %v235 = vsel %vm225, %v214, %v234
    %v236 = vsel %vm227, %v215, %v235
    %v237 = vsel %vm229, %v216, %v236
    %vm240 = vcmask 64512
    %241 = vst.msk [vmem:[%s3] sm:$0xff] %vm240, %v230
    %242 = vst.msk [vmem:[%s3 + $0x8] sm:$0xff] %vm240, %v237
    // Predicated region
    $region22: #{tpu_custom_call.1} parent=1 // pred_check
      _
    $region23: #{tpu_custom_call.1} parent=1 // pred_check_branch
      %244 = sbr.rel (0) target = $region25
    $region24: #{tpu_custom_call.1} parent=1 // pred_region
      _
    $region25: #{tpu_custom_call.1} parent=1 // pred_fallthru
      _
    // Predicated region
    $region26: #{tpu_custom_call.1} parent=1 // pred_check
      _
    $region27: #{tpu_custom_call.1} parent=1 // pred_check_branch
      %246 = sbr.rel (0) target = $region29
    $region28: #{tpu_custom_call.1} parent=1 // pred_region
      _
    $region29: #{tpu_custom_call.1} parent=1 // pred_fallthru
      _
    %247 = vsyncpa [#allocation3], 1
    %248 = vsyncpa [#allocation5], 1

</llo_original>
